<compile_context>
chip_gen: v7x
topology: tpu7x:2x2x1
jax: 0.10.0
libtpu: 0.0.40
codegen_flags: <defaults>
</compile_context>

<pallas_src>
import functools

import jax
import jax.numpy as jnp
from jax.experimental import pallas as pl
from jax.experimental.pallas import tpu as pltpu


_OUT_LANES = 128  # lane-dense output slab width (sliced to 1 in the wrapper)


def _log_sigmoid(x):
    # numerically stable logsigmoid(x) = min(x, 0) - log1p(exp(-|x|))
    return jnp.minimum(x, 0.0) - jnp.log1p(jnp.exp(-jnp.abs(x)))


def _net_kernel(x_ref, wih_ref, whh_ref, b_ref, w5_ref, b5_ref, w6_ref, b6_ref,
                out_ref, *, seq_len, hidden, batch):
    T, B, H = seq_len, batch, hidden

    # ---- hoisted loads (outside the serial chain) -------------------------
    whh = whh_ref[...]                                   # (H, 4H)

    # ---- input projection for ALL timesteps in one MXU call ---------------
    # x_ref is the time-major input flattened to (T*B, I); bias folded in here
    # so the recurrence only does  h @ W_hh + xg[t].
    xg = (jnp.dot(x_ref[...], wih_ref[...],
                  preferred_element_type=jnp.float32)
          + b_ref[...])                                  # (T*B, 4H)

    # ---- LSTM recurrence ---------------------------------------------------
    # T is static and small: the Python loop fully unrolls (same effect as
    # lax.fori_loop(..., unroll=True)), giving the scheduler cross-step
    # visibility.  h/c live in vregs as loop-carried values.
    h = jnp.zeros((B, H), jnp.float32)
    c = jnp.zeros((B, H), jnp.float32)
    for t in range(T):
        gates = xg[t * B:(t + 1) * B, :] + jnp.dot(
            h, whh, preferred_element_type=jnp.float32)  # (B, 4H) full-lane
        s = jax.nn.sigmoid(gates)                        # full-lane EUP
        u = jnp.tanh(gates)                              # full-lane EUP
        i_g = s[:, 0 * H:1 * H]
        f_g = s[:, 1 * H:2 * H]
        g_g = u[:, 2 * H:3 * H]
        o_g = s[:, 3 * H:4 * H]
        c = f_g * c + i_g * g_g
        h = o_g * jnp.tanh(c)

    # ---- head: tanh -> (dropout=id) -> fc5 -> logsigmoid -> (id) -> fc6 ----
    h_last = jnp.tanh(h)                                 # (B, H)
    z5 = jnp.dot(h_last, w5_ref[...],
                 preferred_element_type=jnp.float32) + b5_ref[...]
    a5 = _log_sigmoid(z5)                                # (B, H)

    # fc6 as a lane reduction (no 1-column MXU matmul), then broadcast to a
    # lane-dense output slab so the final store is a full, unmasked vst.
    z6 = jnp.sum(a5 * w6_ref[...], axis=-1, keepdims=True) + b6_ref[...]  # (B, 1)
    out_ref[...] = jnp.broadcast_to(z6, out_ref.shape).astype(out_ref.dtype)


def net_forward(x_btI, params):
    """x_btI: (B, T, I) batch-first, like PyTorch. Returns (B, 1)."""
    B, T, I = x_btI.shape
    H = params["w_hh_t"].shape[0]

    # Pad batch to a multiple of 8 sublanes so every vreg op / MXU operand is
    # full-tile; padded rows are zeros and are sliced away at the end.
    B_pad = ((B + 7) // 8) * 8
    x_tbi = jnp.transpose(x_btI, (1, 0, 2))              # time-major (T, B, I)
    if B_pad != B:
        x_tbi = jnp.pad(x_tbi, ((0, 0), (0, B_pad - B), (0, 0)))
    x_2d = x_tbi.reshape(T * B_pad, I)                   # rows grouped by step

    kernel = functools.partial(_net_kernel, seq_len=T, hidden=H, batch=B_pad)
    vmem = pl.BlockSpec(memory_space=pltpu.VMEM)

    # TODO(synk): for scaled-up configs (large T*B*I / H, esp. on v7x 64 MiB
    # VMEM) switch x to a grid=(T,) BlockSpec((1, B_pad, I)) pipeline with
    # dimension_semantics=("arbitrary",) + vmem_limit_bytes, and add a leading
    # "parallel" batch-tile axis so both v7x TensorCores get work.  At these
    # shapes everything fits in VMEM comfortably, so no grid is used.
    out = pl.pallas_call(
        kernel,
        out_shape=jax.ShapeDtypeStruct((B_pad, _OUT_LANES), jnp.float32),
        in_specs=[vmem] * 8,
        out_specs=vmem,
    )(
        x_2d,
        params["w_ih_t"],   # (I, 4H)
        params["w_hh_t"],   # (H, 4H)
        params["b_gate"],   # (1, 4H)  = b_ih + b_hh
        params["w5_t"],     # (H, H)
        params["b5"],       # (1, H)
        params["w6_row"],   # (1, H)   fc6 weight as a row (lane reduction)
        params["b6"],       # (1, 1)
    )
    return out[:B, :1]


def init_params(key, input_size, hidden_size):
    """Deterministic init mimicking PyTorch's U(-1/sqrt(H), 1/sqrt(H))."""
    H, I = hidden_size, input_size
    bound = 1.0 / jnp.sqrt(jnp.float32(H))
    ks = jax.random.split(key, 8)
    u = lambda k, shape: jax.random.uniform(k, shape, jnp.float32, -bound, bound)
    w_ih = u(ks[0], (4 * H, I))       # PyTorch weight_ih_l0
    w_hh = u(ks[1], (4 * H, H))       # PyTorch weight_hh_l0
    b_ih = u(ks[2], (4 * H,))
    b_hh = u(ks[3], (4 * H,))
    w5 = u(ks[4], (H, H))
    b5 = u(ks[5], (H,))
    w6 = u(ks[6], (1, H))
    b6 = u(ks[7], (1,))
    # NOTE: norm, fc2, fc3, fc4 exist in __init__ but are unused in forward().
    return {
        "w_ih_t": w_ih.T,                      # (I, 4H)
        "w_hh_t": w_hh.T,                      # (H, 4H)
        "b_gate": (b_ih + b_hh)[None, :],      # (1, 4H)
        "w5_t": w5.T,                          # (H, H)
        "b5": b5[None, :],                     # (1, H)
        "w6_row": w6,                          # (1, H)
        "b6": b6[None, :],                     # (1, 1)
    }


def _reference_forward(x_btI, params):
    """Pure-JAX reference (same math, no Pallas) for a sanity check."""
    B, T, I = x_btI.shape
    H = params["w_hh_t"].shape[0]
    h = jnp.zeros((B, H), jnp.float32)
    c = jnp.zeros((B, H), jnp.float32)
    for t in range(T):
        gates = (x_btI[:, t, :] @ params["w_ih_t"] + h @ params["w_hh_t"]
                 + params["b_gate"])
        i_g = jax.nn.sigmoid(gates[:, 0 * H:1 * H])
        f_g = jax.nn.sigmoid(gates[:, 1 * H:2 * H])
        g_g = jnp.tanh(gates[:, 2 * H:3 * H])
        o_g = jax.nn.sigmoid(gates[:, 3 * H:4 * H])
        c = f_g * c + i_g * g_g
        h = o_g * jnp.tanh(c)
    x = jnp.tanh(h)
    x = _log_sigmoid(x @ params["w5_t"] + params["b5"])
    return jnp.sum(x * params["w6_row"], axis=-1, keepdims=True) + params["b6"]


if __name__ == "__main__":
    B, T, I, H = 2, 8, 8, 32   # batch, seq, input_size, hidden_size

    key = jax.random.PRNGKey(0)
    k_x, k_p = jax.random.split(key)
    x = jax.random.normal(k_x, (B, T, I), dtype=jnp.float32)
    params = init_params(k_p, input_size=I, hidden_size=H)

    out = net_forward(x, params)
    jax.block_until_ready(out)
    assert out.shape == (B, 1) and out.dtype == jnp.float32

    ref = _reference_forward(x, params)
    assert jnp.allclose(out, ref, rtol=2e-2, atol=2e-2), (out, ref)

    print("KERNEL_OK")
</pallas_src>

<mosaic_0001>
module attributes {stable_mosaic.version = 11 : i64} {
  func.func @_net_kernel(%arg0: memref<64x8xf32, #tpu.memory_space<vmem>>, %arg1: memref<8x128xf32, #tpu.memory_space<vmem>>, %arg2: memref<32x128xf32, #tpu.memory_space<vmem>>, %arg3: memref<1x128xf32, #tpu.memory_space<vmem>>, %arg4: memref<32x32xf32, #tpu.memory_space<vmem>>, %arg5: memref<1x32xf32, #tpu.memory_space<vmem>>, %arg6: memref<1x32xf32, #tpu.memory_space<vmem>>, %arg7: memref<1x1xf32, #tpu.memory_space<vmem>>, %arg8: memref<8x128xf32, #tpu.memory_space<vmem>>) attributes {dimension_semantics = [], scalar_prefetch = 0 : i64, scratch_operands = 0 : i64, tpu.core_type = #tpu.core_type<tc>} {
    %c0 = arith.constant 0 : index
    %c0_0 = arith.constant 0 : index
    %0 = vector.load %arg2[%c0, %c0_0] : memref<32x128xf32, #tpu.memory_space<vmem>>, vector<32x128xf32>
    %c0_1 = arith.constant 0 : index
    %c0_2 = arith.constant 0 : index
    %1 = vector.load %arg0[%c0_1, %c0_2] : memref<64x8xf32, #tpu.memory_space<vmem>>, vector<64x8xf32>
    %c0_3 = arith.constant 0 : index
    %c0_4 = arith.constant 0 : index
    %2 = vector.load %arg1[%c0_3, %c0_4] : memref<8x128xf32, #tpu.memory_space<vmem>>, vector<8x128xf32>
    %cst = arith.constant dense<0.000000e+00> : vector<64x128xf32>
    %3 = tpu.matmul %1, %2, %cst {dimension_numbers = #tpu.dot_dimension_numbers<[1], [0], [0], [1], [0, 0, 1, 1], [], []>} : vector<64x8xf32>, vector<8x128xf32>, vector<64x128xf32> -> vector<64x128xf32>
    %c0_5 = arith.constant 0 : index
    %c0_6 = arith.constant 0 : index
    %4 = vector.load %arg3[%c0_5, %c0_6] : memref<1x128xf32, #tpu.memory_space<vmem>>, vector<1x128xf32>
    %5 = vector.broadcast %4 : vector<1x128xf32> to vector<64x128xf32>
    %6 = arith.addf %3, %5 : vector<64x128xf32>
    %cst_7 = arith.constant 0.000000e+00 : f32
    %7 = vector.broadcast %cst_7 : f32 to vector<8x32xf32>
    %cst_8 = arith.constant 0.000000e+00 : f32
    %8 = vector.broadcast %cst_8 : f32 to vector<8x32xf32>
    %9 = vector.extract_strided_slice %6 {offsets = [0, 0], sizes = [8, 128], strides = [1, 1]} : vector<64x128xf32> to vector<8x128xf32>
    %cst_9 = arith.constant dense<0.000000e+00> : vector<8x128xf32>
    %10 = tpu.matmul %7, %0, %cst_9 {dimension_numbers = #tpu.dot_dimension_numbers<[1], [0], [0], [1], [0, 0, 1, 1], [], []>} : vector<8x32xf32>, vector<32x128xf32>, vector<8x128xf32> -> vector<8x128xf32>
    %11 = arith.addf %9, %10 : vector<8x128xf32>
    %12 = arith.negf %11 : vector<8x128xf32>
    %13 = math.exp %12 : vector<8x128xf32>
    %cst_10 = arith.constant 1.000000e+00 : f32
    %14 = vector.broadcast %cst_10 : f32 to vector<8x128xf32>
    %15 = arith.addf %14, %13 : vector<8x128xf32>
    %16 = arith.divf %14, %15 : vector<8x128xf32>
    %17 = math.tanh %11 : vector<8x128xf32>
    %18 = vector.extract_strided_slice %16 {offsets = [0, 0], sizes = [8, 32], strides = [1, 1]} : vector<8x128xf32> to vector<8x32xf32>
    %19 = vector.extract_strided_slice %16 {offsets = [0, 32], sizes = [8, 32], strides = [1, 1]} : vector<8x128xf32> to vector<8x32xf32>
    %20 = vector.extract_strided_slice %17 {offsets = [0, 64], sizes = [8, 32], strides = [1, 1]} : vector<8x128xf32> to vector<8x32xf32>
    %21 = vector.extract_strided_slice %16 {offsets = [0, 96], sizes = [8, 32], strides = [1, 1]} : vector<8x128xf32> to vector<8x32xf32>
    %22 = arith.mulf %19, %8 : vector<8x32xf32>
    %23 = arith.mulf %18, %20 : vector<8x32xf32>
    %24 = arith.addf %22, %23 : vector<8x32xf32>
    %25 = math.tanh %24 : vector<8x32xf32>
    %26 = arith.mulf %21, %25 : vector<8x32xf32>
    %27 = vector.extract_strided_slice %6 {offsets = [8, 0], sizes = [8, 128], strides = [1, 1]} : vector<64x128xf32> to vector<8x128xf32>
    %cst_11 = arith.constant dense<0.000000e+00> : vector<8x128xf32>
    %28 = tpu.matmul %26, %0, %cst_11 {dimension_numbers = #tpu.dot_dimension_numbers<[1], [0], [0], [1], [0, 0, 1, 1], [], []>} : vector<8x32xf32>, vector<32x128xf32>, vector<8x128xf32> -> vector<8x128xf32>
    %29 = arith.addf %27, %28 : vector<8x128xf32>
    %30 = arith.negf %29 : vector<8x128xf32>
    %31 = math.exp %30 : vector<8x128xf32>
    %cst_12 = arith.constant 1.000000e+00 : f32
    %32 = vector.broadcast %cst_12 : f32 to vector<8x128xf32>
    %33 = arith.addf %32, %31 : vector<8x128xf32>
    %34 = arith.divf %32, %33 : vector<8x128xf32>
    %35 = math.tanh %29 : vector<8x128xf32>
    %36 = vector.extract_strided_slice %34 {offsets = [0, 0], sizes = [8, 32], strides = [1, 1]} : vector<8x128xf32> to vector<8x32xf32>
    %37 = vector.extract_strided_slice %34 {offsets = [0, 32], sizes = [8, 32], strides = [1, 1]} : vector<8x128xf32> to vector<8x32xf32>
    %38 = vector.extract_strided_slice %35 {offsets = [0, 64], sizes = [8, 32], strides = [1, 1]} : vector<8x128xf32> to vector<8x32xf32>
    %39 = vector.extract_strided_slice %34 {offsets = [0, 96], sizes = [8, 32], strides = [1, 1]} : vector<8x128xf32> to vector<8x32xf32>
    %40 = arith.mulf %37, %24 : vector<8x32xf32>
    %41 = arith.mulf %36, %38 : vector<8x32xf32>
    %42 = arith.addf %40, %41 : vector<8x32xf32>
    %43 = math.tanh %42 : vector<8x32xf32>
    %44 = arith.mulf %39, %43 : vector<8x32xf32>
    %45 = vector.extract_strided_slice %6 {offsets = [16, 0], sizes = [8, 128], strides = [1, 1]} : vector<64x128xf32> to vector<8x128xf32>
    %cst_13 = arith.constant dense<0.000000e+00> : vector<8x128xf32>
    %46 = tpu.matmul %44, %0, %cst_13 {dimension_numbers = #tpu.dot_dimension_numbers<[1], [0], [0], [1], [0, 0, 1, 1], [], []>} : vector<8x32xf32>, vector<32x128xf32>, vector<8x128xf32> -> vector<8x128xf32>
    %47 = arith.addf %45, %46 : vector<8x128xf32>
    %48 = arith.negf %47 : vector<8x128xf32>
    %49 = math.exp %48 : vector<8x128xf32>
    %cst_14 = arith.constant 1.000000e+00 : f32
    %50 = vector.broadcast %cst_14 : f32 to vector<8x128xf32>
    %51 = arith.addf %50, %49 : vector<8x128xf32>
    %52 = arith.divf %50, %51 : vector<8x128xf32>
    %53 = math.tanh %47 : vector<8x128xf32>
    %54 = vector.extract_strided_slice %52 {offsets = [0, 0], sizes = [8, 32], strides = [1, 1]} : vector<8x128xf32> to vector<8x32xf32>
    %55 = vector.extract_strided_slice %52 {offsets = [0, 32], sizes = [8, 32], strides = [1, 1]} : vector<8x128xf32> to vector<8x32xf32>
    %56 = vector.extract_strided_slice %53 {offsets = [0, 64], sizes = [8, 32], strides = [1, 1]} : vector<8x128xf32> to vector<8x32xf32>
    %57 = vector.extract_strided_slice %52 {offsets = [0, 96], sizes = [8, 32], strides = [1, 1]} : vector<8x128xf32> to vector<8x32xf32>
    %58 = arith.mulf %55, %42 : vector<8x32xf32>
    %59 = arith.mulf %54, %56 : vector<8x32xf32>
    %60 = arith.addf %58, %59 : vector<8x32xf32>
    %61 = math.tanh %60 : vector<8x32xf32>
    %62 = arith.mulf %57, %61 : vector<8x32xf32>
    %63 = vector.extract_strided_slice %6 {offsets = [24, 0], sizes = [8, 128], strides = [1, 1]} : vector<64x128xf32> to vector<8x128xf32>
    %cst_15 = arith.constant dense<0.000000e+00> : vector<8x128xf32>
    %64 = tpu.matmul %62, %0, %cst_15 {dimension_numbers = #tpu.dot_dimension_numbers<[1], [0], [0], [1], [0, 0, 1, 1], [], []>} : vector<8x32xf32>, vector<32x128xf32>, vector<8x128xf32> -> vector<8x128xf32>
    %65 = arith.addf %63, %64 : vector<8x128xf32>
    %66 = arith.negf %65 : vector<8x128xf32>
    %67 = math.exp %66 : vector<8x128xf32>
    %cst_16 = arith.constant 1.000000e+00 : f32
    %68 = vector.broadcast %cst_16 : f32 to vector<8x128xf32>
    %69 = arith.addf %68, %67 : vector<8x128xf32>
    %70 = arith.divf %68, %69 : vector<8x128xf32>
    %71 = math.tanh %65 : vector<8x128xf32>
    %72 = vector.extract_strided_slice %70 {offsets = [0, 0], sizes = [8, 32], strides = [1, 1]} : vector<8x128xf32> to vector<8x32xf32>
    %73 = vector.extract_strided_slice %70 {offsets = [0, 32], sizes = [8, 32], strides = [1, 1]} : vector<8x128xf32> to vector<8x32xf32>
    %74 = vector.extract_strided_slice %71 {offsets = [0, 64], sizes = [8, 32], strides = [1, 1]} : vector<8x128xf32> to vector<8x32xf32>
    %75 = vector.extract_strided_slice %70 {offsets = [0, 96], sizes = [8, 32], strides = [1, 1]} : vector<8x128xf32> to vector<8x32xf32>
    %76 = arith.mulf %73, %60 : vector<8x32xf32>
    %77 = arith.mulf %72, %74 : vector<8x32xf32>
    %78 = arith.addf %76, %77 : vector<8x32xf32>
    %79 = math.tanh %78 : vector<8x32xf32>
    %80 = arith.mulf %75, %79 : vector<8x32xf32>
    %81 = vector.extract_strided_slice %6 {offsets = [32, 0], sizes = [8, 128], strides = [1, 1]} : vector<64x128xf32> to vector<8x128xf32>
    %cst_17 = arith.constant dense<0.000000e+00> : vector<8x128xf32>
    %82 = tpu.matmul %80, %0, %cst_17 {dimension_numbers = #tpu.dot_dimension_numbers<[1], [0], [0], [1], [0, 0, 1, 1], [], []>} : vector<8x32xf32>, vector<32x128xf32>, vector<8x128xf32> -> vector<8x128xf32>
    %83 = arith.addf %81, %82 : vector<8x128xf32>
    %84 = arith.negf %83 : vector<8x128xf32>
    %85 = math.exp %84 : vector<8x128xf32>
    %cst_18 = arith.constant 1.000000e+00 : f32
    %86 = vector.broadcast %cst_18 : f32 to vector<8x128xf32>
    %87 = arith.addf %86, %85 : vector<8x128xf32>
    %88 = arith.divf %86, %87 : vector<8x128xf32>
    %89 = math.tanh %83 : vector<8x128xf32>
    %90 = vector.extract_strided_slice %88 {offsets = [0, 0], sizes = [8, 32], strides = [1, 1]} : vector<8x128xf32> to vector<8x32xf32>
    %91 = vector.extract_strided_slice %88 {offsets = [0, 32], sizes = [8, 32], strides = [1, 1]} : vector<8x128xf32> to vector<8x32xf32>
    %92 = vector.extract_strided_slice %89 {offsets = [0, 64], sizes = [8, 32], strides = [1, 1]} : vector<8x128xf32> to vector<8x32xf32>
    %93 = vector.extract_strided_slice %88 {offsets = [0, 96], sizes = [8, 32], strides = [1, 1]} : vector<8x128xf32> to vector<8x32xf32>
    %94 = arith.mulf %91, %78 : vector<8x32xf32>
    %95 = arith.mulf %90, %92 : vector<8x32xf32>
    %96 = arith.addf %94, %95 : vector<8x32xf32>
    %97 = math.tanh %96 : vector<8x32xf32>
    %98 = arith.mulf %93, %97 : vector<8x32xf32>
    %99 = vector.extract_strided_slice %6 {offsets = [40, 0], sizes = [8, 128], strides = [1, 1]} : vector<64x128xf32> to vector<8x128xf32>
    %cst_19 = arith.constant dense<0.000000e+00> : vector<8x128xf32>
    %100 = tpu.matmul %98, %0, %cst_19 {dimension_numbers = #tpu.dot_dimension_numbers<[1], [0], [0], [1], [0, 0, 1, 1], [], []>} : vector<8x32xf32>, vector<32x128xf32>, vector<8x128xf32> -> vector<8x128xf32>
    %101 = arith.addf %99, %100 : vector<8x128xf32>
    %102 = arith.negf %101 : vector<8x128xf32>
    %103 = math.exp %102 : vector<8x128xf32>
    %cst_20 = arith.constant 1.000000e+00 : f32
    %104 = vector.broadcast %cst_20 : f32 to vector<8x128xf32>
    %105 = arith.addf %104, %103 : vector<8x128xf32>
    %106 = arith.divf %104, %105 : vector<8x128xf32>
    %107 = math.tanh %101 : vector<8x128xf32>
    %108 = vector.extract_strided_slice %106 {offsets = [0, 0], sizes = [8, 32], strides = [1, 1]} : vector<8x128xf32> to vector<8x32xf32>
    %109 = vector.extract_strided_slice %106 {offsets = [0, 32], sizes = [8, 32], strides = [1, 1]} : vector<8x128xf32> to vector<8x32xf32>
    %110 = vector.extract_strided_slice %107 {offsets = [0, 64], sizes = [8, 32], strides = [1, 1]} : vector<8x128xf32> to vector<8x32xf32>
    %111 = vector.extract_strided_slice %106 {offsets = [0, 96], sizes = [8, 32], strides = [1, 1]} : vector<8x128xf32> to vector<8x32xf32>
    %112 = arith.mulf %109, %96 : vector<8x32xf32>
    %113 = arith.mulf %108, %110 : vector<8x32xf32>
    %114 = arith.addf %112, %113 : vector<8x32xf32>
    %115 = math.tanh %114 : vector<8x32xf32>
    %116 = arith.mulf %111, %115 : vector<8x32xf32>
    %117 = vector.extract_strided_slice %6 {offsets = [48, 0], sizes = [8, 128], strides = [1, 1]} : vector<64x128xf32> to vector<8x128xf32>
    %cst_21 = arith.constant dense<0.000000e+00> : vector<8x128xf32>
    %118 = tpu.matmul %116, %0, %cst_21 {dimension_numbers = #tpu.dot_dimension_numbers<[1], [0], [0], [1], [0, 0, 1, 1], [], []>} : vector<8x32xf32>, vector<32x128xf32>, vector<8x128xf32> -> vector<8x128xf32>
    %119 = arith.addf %117, %118 : vector<8x128xf32>
    %120 = arith.negf %119 : vector<8x128xf32>
    %121 = math.exp %120 : vector<8x128xf32>
    %cst_22 = arith.constant 1.000000e+00 : f32
    %122 = vector.broadcast %cst_22 : f32 to vector<8x128xf32>
    %123 = arith.addf %122, %121 : vector<8x128xf32>
    %124 = arith.divf %122, %123 : vector<8x128xf32>
    %125 = math.tanh %119 : vector<8x128xf32>
    %126 = vector.extract_strided_slice %124 {offsets = [0, 0], sizes = [8, 32], strides = [1, 1]} : vector<8x128xf32> to vector<8x32xf32>
    %127 = vector.extract_strided_slice %124 {offsets = [0, 32], sizes = [8, 32], strides = [1, 1]} : vector<8x128xf32> to vector<8x32xf32>
    %128 = vector.extract_strided_slice %125 {offsets = [0, 64], sizes = [8, 32], strides = [1, 1]} : vector<8x128xf32> to vector<8x32xf32>
    %129 = vector.extract_strided_slice %124 {offsets = [0, 96], sizes = [8, 32], strides = [1, 1]} : vector<8x128xf32> to vector<8x32xf32>
    %130 = arith.mulf %127, %114 : vector<8x32xf32>
    %131 = arith.mulf %126, %128 : vector<8x32xf32>
    %132 = arith.addf %130, %131 : vector<8x32xf32>
    %133 = math.tanh %132 : vector<8x32xf32>
    %134 = arith.mulf %129, %133 : vector<8x32xf32>
    %135 = vector.extract_strided_slice %6 {offsets = [56, 0], sizes = [8, 128], strides = [1, 1]} : vector<64x128xf32> to vector<8x128xf32>
    %cst_23 = arith.constant dense<0.000000e+00> : vector<8x128xf32>
    %136 = tpu.matmul %134, %0, %cst_23 {dimension_numbers = #tpu.dot_dimension_numbers<[1], [0], [0], [1], [0, 0, 1, 1], [], []>} : vector<8x32xf32>, vector<32x128xf32>, vector<8x128xf32> -> vector<8x128xf32>
    %137 = arith.addf %135, %136 : vector<8x128xf32>
    %138 = arith.negf %137 : vector<8x128xf32>
    %139 = math.exp %138 : vector<8x128xf32>
    %cst_24 = arith.constant 1.000000e+00 : f32
    %140 = vector.broadcast %cst_24 : f32 to vector<8x128xf32>
    %141 = arith.addf %140, %139 : vector<8x128xf32>
    %142 = arith.divf %140, %141 : vector<8x128xf32>
    %143 = math.tanh %137 : vector<8x128xf32>
    %144 = vector.extract_strided_slice %142 {offsets = [0, 0], sizes = [8, 32], strides = [1, 1]} : vector<8x128xf32> to vector<8x32xf32>
    %145 = vector.extract_strided_slice %142 {offsets = [0, 32], sizes = [8, 32], strides = [1, 1]} : vector<8x128xf32> to vector<8x32xf32>
    %146 = vector.extract_strided_slice %143 {offsets = [0, 64], sizes = [8, 32], strides = [1, 1]} : vector<8x128xf32> to vector<8x32xf32>
    %147 = vector.extract_strided_slice %142 {offsets = [0, 96], sizes = [8, 32], strides = [1, 1]} : vector<8x128xf32> to vector<8x32xf32>
    %148 = arith.mulf %145, %132 : vector<8x32xf32>
    %149 = arith.mulf %144, %146 : vector<8x32xf32>
    %150 = arith.addf %148, %149 : vector<8x32xf32>
    %151 = math.tanh %150 : vector<8x32xf32>
    %152 = arith.mulf %147, %151 : vector<8x32xf32>
    %153 = math.tanh %152 : vector<8x32xf32>
    %c0_25 = arith.constant 0 : index
    %c0_26 = arith.constant 0 : index
    %154 = vector.load %arg4[%c0_25, %c0_26] : memref<32x32xf32, #tpu.memory_space<vmem>>, vector<32x32xf32>
    %cst_27 = arith.constant dense<0.000000e+00> : vector<8x32xf32>
    %155 = tpu.matmul %153, %154, %cst_27 {dimension_numbers = #tpu.dot_dimension_numbers<[1], [0], [0], [1], [0, 0, 1, 1], [], []>} : vector<8x32xf32>, vector<32x32xf32>, vector<8x32xf32> -> vector<8x32xf32>
    %c0_28 = arith.constant 0 : index
    %c0_29 = arith.constant 0 : index
    %156 = vector.load %arg5[%c0_28, %c0_29] : memref<1x32xf32, #tpu.memory_space<vmem>>, vector<1x32xf32>
    %157 = vector.broadcast %156 : vector<1x32xf32> to vector<8x32xf32>
    %158 = arith.addf %155, %157 : vector<8x32xf32>
    %cst_30 = arith.constant 0.000000e+00 : f32
    %159 = vector.broadcast %cst_30 : f32 to vector<8x32xf32>
    %160 = arith.minimumf %158, %159 : vector<8x32xf32>
    %161 = math.absf %158 : vector<8x32xf32>
    %cst_31 = arith.constant 0.000000e+00 : f32
    %162 = vector.broadcast %cst_31 : f32 to vector<8x32xf32>
    %163 = arith.subf %162, %161 : vector<8x32xf32>
    %164 = math.exp %163 : vector<8x32xf32>
    %165 = math.log1p %164 : vector<8x32xf32>
    %166 = arith.subf %160, %165 : vector<8x32xf32>
    %c0_32 = arith.constant 0 : index
    %c0_33 = arith.constant 0 : index
    %167 = vector.load %arg6[%c0_32, %c0_33] : memref<1x32xf32, #tpu.memory_space<vmem>>, vector<1x32xf32>
    %168 = vector.broadcast %167 : vector<1x32xf32> to vector<8x32xf32>
    %169 = arith.mulf %166, %168 : vector<8x32xf32>
    %cst_34 = arith.constant dense<0.000000e+00> : vector<8xf32>
    %170 = vector.multi_reduction <add>, %169, %cst_34 [1] : vector<8x32xf32> to vector<8xf32>
    %171 = vector.shape_cast %170 : vector<8xf32> to vector<8x1xf32>
    %c0_35 = arith.constant 0 : index
    %c0_36 = arith.constant 0 : index
    %172 = vector.load %arg7[%c0_35, %c0_36] : memref<1x1xf32, #tpu.memory_space<vmem>>, vector<1x1xf32>
    %173 = vector.broadcast %172 : vector<1x1xf32> to vector<8x1xf32>
    %174 = arith.addf %171, %173 : vector<8x1xf32>
    %175 = vector.shape_cast %174 : vector<8x1xf32> to vector<8x1xf32>
    %176 = vector.broadcast %175 : vector<8x1xf32> to vector<8x128xf32>
    %c0_37 = arith.constant 0 : index
    %c0_38 = arith.constant 0 : index
    %177 = vector.load %arg8[%c0_37, %c0_38] : memref<8x128xf32, #tpu.memory_space<vmem>>, vector<8x128xf32>
    tpu.vector_store %arg8[%c0_37, %c0_38], %176 {strides = array<i32>} : memref<8x128xf32, #tpu.memory_space<vmem>>, vector<8x128xf32>,
    return
  }
}

</mosaic_0001>

<llo_original>
// kernel: tpu_custom_call.1
$region0: #{tpu_custom_call.1}
  #allocation0 [shape = 'u32[]', space=smem, size = 0x4, offset = 0x4, fixed_abs, tag = 'smem constant byte address 0x4 - core index']
  #allocation1 [shape = 'u32[144,128]{1,0:T(1,128)}', space=vmem, size = 0x12000, scoped, tag = 'internal scratch']
  #allocation2 [shape = 'f32[1,1]{1,0:T(1,128)S(1)}', space=vmem, size = 0x200, scoped, tag = 'scoped memory for tpu_custom_call.1']
  %s0 = inlined_call_operand.vmem [shape: f32[64,8], index: 0, kind: input, shape index: {}]
  %s1 = inlined_call_operand.vmem [shape: f32[8,128], index: 1, kind: input, shape index: {}]
  %s2 = inlined_call_operand.vmem [shape: f32[32,128], index: 2, kind: input, shape index: {}]
  %s3 = inlined_call_operand.vmem [shape: f32[1,128], index: 3, kind: input, shape index: {}]
  %s4 = inlined_call_operand.vmem [shape: f32[32,32], index: 4, kind: input, shape index: {}]
  %s5 = inlined_call_operand.vmem [shape: f32[1,32], index: 5, kind: input, shape index: {}]
  %s6 = inlined_call_operand.vmem [shape: f32[1,32], index: 6, kind: input, shape index: {}]
  %s7 = inlined_call_operand.<no memory space> [shape: f32[1,1], index: 7, kind: input, shape index: {}]
  %s8 = inlined_call_operand.hbm [shape: f32[8,128], index: 8, kind: output, shape index: {}]
  %s9 = sld [smem:[#allocation0]]
  $region42: #{tpu_custom_call.1} parent=0
    _
  %s11 = ssub.s32 1, %s9
  %s12 = scalar_select 0, %s11, %s9
  %v13 = vstv %s7
  %14 = vst [vmem:[#allocation2] sm:$0x1] %v13
  $region1: #{tpu_custom_call.1} parent=0
    #allocation3 [shape = 'u8[4096]{0}', space=vmem, size = 0x1000, scoped, tag = 'output window, operand 0, single buffered']
    #allocation4 [shape = 's32[1]{0}', space=sflag, size = 0x4, scoped, tag = 'scoped memory for tpu_custom_call.1']
    %15 = vsyncpa [#allocation4], 0
    // Predicated region
    $region2: #{tpu_custom_call.1} parent=1 // pred_check
      _
    $region3: #{tpu_custom_call.1} parent=1 // pred_check_branch
      %17 = sbr.rel (0) target = $region5
    $region4: #{tpu_custom_call.1} parent=1 // pred_region
      _
    $region5: #{tpu_custom_call.1} parent=1 // pred_fallthru
      _
    // Predicated region
    $region6: #{tpu_custom_call.1} parent=1 // pred_check
      _
    $region7: #{tpu_custom_call.1} parent=1 // pred_check_branch
      %19 = sbr.rel (0) target = $region9
    $region8: #{tpu_custom_call.1} parent=1 // pred_region
      _
    $region9: #{tpu_custom_call.1} parent=1 // pred_fallthru
      _
    // Predicated region
    $region10: #{tpu_custom_call.1} parent=1 // pred_check
      _
    $region11: #{tpu_custom_call.1} parent=1 // pred_check_branch
      %21 = sbr.rel (0) target = $region13
    $region12: #{tpu_custom_call.1} parent=1 // pred_region
      _
    $region13: #{tpu_custom_call.1} parent=1 // pred_fallthru
      _
    // Predicated region
    $region14: #{tpu_custom_call.1} parent=1 // pred_check
      _
    $region15: #{tpu_custom_call.1} parent=1 // pred_check_branch
      %23 = sbr.rel (0) target = $region17
    $region16: #{tpu_custom_call.1} parent=1 // pred_region
      _
    $region17: #{tpu_custom_call.1} parent=1 // pred_fallthru
      _
    // Predicated region
    $region18: #{tpu_custom_call.1} parent=1 // pred_check
      _
    $region19: #{tpu_custom_call.1} parent=1 // pred_check_branch
      %25 = sbr.rel (0) target = $region21
    $region20: #{tpu_custom_call.1} parent=1 // pred_region
      _
    $region21: #{tpu_custom_call.1} parent=1 // pred_fallthru
      _
    // Predicated region
    $region22: #{tpu_custom_call.1} parent=1 // pred_check
      _
    $region23: #{tpu_custom_call.1} parent=1 // pred_check_branch
      %27 = sbr.rel (0) target = $region25
    $region24: #{tpu_custom_call.1} parent=1 // pred_region
      _
    $region25: #{tpu_custom_call.1} parent=1 // pred_fallthru
      _
    // Predicated region
    $region26: #{tpu_custom_call.1} parent=1 // pred_check
      _
    $region27: #{tpu_custom_call.1} parent=1 // pred_check_branch
      %29 = sbr.rel (0) target = $region29
    $region28: #{tpu_custom_call.1} parent=1 // pred_region
      _
    $region29: #{tpu_custom_call.1} parent=1 // pred_fallthru
      _
    // Predicated region
    $region30: #{tpu_custom_call.1} parent=1 // pred_check
      _
    $region31: #{tpu_custom_call.1} parent=1 // pred_check_branch
      %31 = sbr.rel (0) target = $region33
    $region32: #{tpu_custom_call.1} parent=1 // pred_region
      _
    $region33: #{tpu_custom_call.1} parent=1 // pred_fallthru
      _
    %v32 = vld [vmem:[%s2] sm:$0xff]
    %v33 = vld [vmem:[%s2 + $0x8] sm:$0xff]
    %v34 = vld [vmem:[%s2 + $0x10] sm:$0xff]
    %v35 = vld [vmem:[%s2 + $0x18] sm:$0xff]
    %v36 = vld [vmem:[%s0] sm:$0xff]
    %v37 = vld [vmem:[%s0 + $0x8] sm:$0xff]
    %v38 = vld [vmem:[%s0 + $0x10] sm:$0xff]
    %v39 = vld [vmem:[%s0 + $0x18] sm:$0xff]
    %v40 = vld [vmem:[%s0 + $0x20] sm:$0xff]
    %v41 = vld [vmem:[%s0 + $0x28] sm:$0xff]
    %v42 = vld [vmem:[%s0 + $0x30] sm:$0xff]
    %v43 = vld [vmem:[%s0 + $0x38] sm:$0xff]
    %v44 = vld [vmem:[%s1] sm:$0xff]
    %v45 = vld [vmem:[%s3] sm:$0x1]
    %v47 = vlaneseq
    %v48 = vshrl.u32 %v47, 7
    %v49 = vsub.s32 0, %v48
    %v50 = vrot.slane %v45, %v49
    %vm52 = vcmask 64512
    %v54 = vsel %vm52, %v36, 0
    %v57 = vsel %vm52, %v37, 0
    %v60 = vsel %vm52, %v38, 0
    %v63 = vsel %vm52, %v39, 0
    %v66 = vsel %vm52, %v40, 0
    %v69 = vsel %vm52, %v41, 0
    %v72 = vsel %vm52, %v42, 0
    %v75 = vsel %vm52, %v43, 0
    %77 = vmatprep.subr.mxu0 0.0
    %78 = vmatpush1.msra.mxu0 %v44
    %79 = vmatprep.subr.mxu0 0.0
    %80 = vmatpush1.msra.mxu0 0.0
    %81 = vmatprep.subr.mxu0 0.0
    %82 = vmatpush1.msra.mxu0 0.0
    %83 = vmatprep.subr.mxu0 0.0
    %84 = vmatpush1.msra.mxu0 0.0
    %85 = vmatprep.subr.mxu0 0.0
    %86 = vmatpush1.msra.mxu0 0.0
    %87 = vmatprep.subr.mxu0 0.0
    %88 = vmatpush1.msra.mxu0 0.0
    %89 = vmatprep.subr.mxu0 0.0
    %90 = vmatpush1.msra.mxu0 0.0
    %91 = vmatprep.subr.mxu0 0.0
    %92 = vmatpush1.msra.mxu0 0.0
    %93 = vmatprep.subr.mxu0 0.0
    %94 = vmatpush1.msra.mxu0 0.0
    %95 = vmatprep.subr.mxu0 0.0
    %96 = vmatpush1.msra.mxu0 0.0
    %97 = vmatprep.subr.mxu0 0.0
    %98 = vmatpush1.msra.mxu0 0.0
    %99 = vmatprep.subr.mxu0 0.0
    %100 = vmatpush1.msra.mxu0 0.0
    %101 = vmatprep.subr.mxu0 0.0
    %102 = vmatpush1.msra.mxu0 0.0
    %103 = vmatprep.subr.mxu0 0.0
    %104 = vmatpush1.msra.mxu0 0.0
    %105 = vmatprep.subr.mxu0 0.0
    %106 = vmatpush1.msra.mxu0 0.0
    %107 = vmatprep.subr.mxu0 0.0
    %108 = vmatpush1.msra.mxu0 0.0
    %109 = vmatprep.subr.mxu0 0.0
    %110 = vmatpush1.msra.mxu0 0.0
    %111 = vmatprep.subr.mxu0 0.0
    %112 = vmatpush1.msra.mxu0 0.0
    %113 = vmatprep.subr.mxu0 0.0
    %114 = vmatpush1.msra.mxu0 0.0
    %115 = vmatprep.subr.mxu0 0.0
    %116 = vmatpush1.msra.mxu0 0.0
    %117 = vmatprep.subr.mxu0 0.0
    %118 = vmatpush1.msra.mxu0 0.0
    %119 = vmatprep.subr.mxu0 0.0
    %120 = vmatpush1.msra.mxu0 0.0
    %121 = vmatprep.subr.mxu0 0.0
    %122 = vmatpush1.msra.mxu0 0.0
    %123 = vmatprep.subr.mxu0 0.0
    %124 = vmatpush1.msra.mxu0 0.0
    %125 = vmatprep.subr.mxu0 0.0
    %126 = vmatpush1.msra.mxu0 0.0
    %127 = vmatprep.subr.mxu0 0.0
    %128 = vmatpush1.msra.mxu0 0.0
    %129 = vmatprep.subr.mxu0 0.0
    %130 = vmatpush1.msra.mxu0 0.0
    %131 = vmatprep.subr.mxu0 0.0
    %132 = vmatpush1.msra.mxu0 0.0
    %133 = vmatprep.subr.mxu0 0.0
    %134 = vmatpush1.msra.mxu0 0.0
    %135 = vmatprep.subr.mxu0 0.0
    %136 = vmatpush1.msra.mxu0 0.0
    %137 = vmatprep.subr.mxu0 0.0
    %138 = vmatpush1.msra.mxu0 0.0
    %139 = vmatprep.subr.mxu0 0.0
    %140 = vmatpush1.msra.mxu0 0.0
    %141 = vmatprep.mubr.f32.mxu0 0.0
    %142 = vmatmul.mubr.f32.gmra.mrb[0].mxu0 %v54
    %v143 = vpop.f32.mrb[0].mxu0
    %v144 = vadd.f32 %v50, %v143
    %v145 = vpop.f32.mrb[0].mxu0
    %146 = vmatprep.mubr.f32.mxu0 0.0
    %147 = vmatmul.mubr.f32.gmra.mrb[0].mxu0 %v57
    %v148 = vpop.f32.mrb[0].mxu0
    %v149 = vadd.f32 %v50, %v148
    %v150 = vpop.f32.mrb[0].mxu0
    %151 = vmatprep.mubr.f32.mxu0 0.0
    %152 = vmatmul.mubr.f32.gmra.mrb[0].mxu0 %v60
    %v153 = vpop.f32.mrb[0].mxu0
    %v154 = vadd.f32 %v50, %v153
    %v155 = vpop.f32.mrb[0].mxu0
    %156 = vmatprep.mubr.f32.mxu0 0.0
    %157 = vmatmul.mubr.f32.gmra.mrb[0].mxu0 %v63
    %v158 = vpop.f32.mrb[0].mxu0
    %v159 = vadd.f32 %v50, %v158
    %v160 = vpop.f32.mrb[0].mxu0
    %161 = vmatprep.mubr.f32.mxu0 0.0
    %162 = vmatmul.mubr.f32.gmra.mrb[0].mxu0 %v66
    %v163 = vpop.f32.mrb[0].mxu0
    %v164 = vadd.f32 %v50, %v163
    %v165 = vpop.f32.mrb[0].mxu0
    %166 = vmatprep.mubr.f32.mxu0 0.0
    %167 = vmatmul.mubr.f32.gmra.mrb[0].mxu0 %v69
    %v168 = vpop.f32.mrb[0].mxu0
    %v169 = vadd.f32 %v50, %v168
    %v170 = vpop.f32.mrb[0].mxu0
    %171 = vmatprep.mubr.f32.mxu0 0.0
    %172 = vmatmul.mubr.f32.gmra.mrb[0].mxu0 %v72
    %v173 = vpop.f32.mrb[0].mxu0
    %v174 = vadd.f32 %v50, %v173
    %v175 = vpop.f32.mrb[0].mxu0
    %176 = vmatprep.mubr.f32.mxu0 0.0
    %177 = vmatmul.mubr.f32.gmra.mrb[0].mxu0 %v75
    %v178 = vpop.f32.mrb[0].mxu0
    %v179 = vadd.f32 %v50, %v178
    %v180 = vpop.f32.mrb[0].mxu0
    %181 = vdwg.mxu0
    %vm182 = vcmask 261120
    %v184 = vsel %vm182, 0.0, 0
    %186 = vmatprep.subr.mxu0 0.0
    %187 = vmatpush1.msra.mxu0 %v32
    %188 = vmatprep.subr.mxu0 0.0
    %189 = vmatpush1.msra.mxu0 %v33
    %190 = vmatprep.subr.mxu0 0.0
    %191 = vmatpush1.msra.mxu0 %v34
    %192 = vmatprep.subr.mxu0 0.0
    %193 = vmatpush1.msra.mxu0 %v35
    %194 = vmatprep.subr.mxu0 0.0
    %195 = vmatpush1.msra.mxu0 0.0
    %196 = vmatprep.subr.mxu0 0.0
    %197 = vmatpush1.msra.mxu0 0.0
    %198 = vmatprep.subr.mxu0 0.0
    %199 = vmatpush1.msra.mxu0 0.0
    %200 = vmatprep.subr.mxu0 0.0
    %201 = vmatpush1.msra.mxu0 0.0
    %202 = vmatprep.subr.mxu0 0.0
    %203 = vmatpush1.msra.mxu0 0.0
    %204 = vmatprep.subr.mxu0 0.0
    %205 = vmatpush1.msra.mxu0 0.0
    %206 = vmatprep.subr.mxu0 0.0
    %207 = vmatpush1.msra.mxu0 0.0
    %208 = vmatprep.subr.mxu0 0.0
    %209 = vmatpush1.msra.mxu0 0.0
    %210 = vmatprep.subr.mxu0 0.0
    %211 = vmatpush1.msra.mxu0 0.0
    %212 = vmatprep.subr.mxu0 0.0
    %213 = vmatpush1.msra.mxu0 0.0
    %214 = vmatprep.subr.mxu0 0.0
    %215 = vmatpush1.msra.mxu0 0.0
    %216 = vmatprep.subr.mxu0 0.0
    %217 = vmatpush1.msra.mxu0 0.0
    %218 = vmatprep.subr.mxu0 0.0
    %219 = vmatpush1.msra.mxu0 0.0
    %220 = vmatprep.subr.mxu0 0.0
    %221 = vmatpush1.msra.mxu0 0.0
    %222 = vmatprep.subr.mxu0 0.0
    %223 = vmatpush1.msra.mxu0 0.0
    %224 = vmatprep.subr.mxu0 0.0
    %225 = vmatpush1.msra.mxu0 0.0
    %226 = vmatprep.subr.mxu0 0.0
    %227 = vmatpush1.msra.mxu0 0.0
    %228 = vmatprep.subr.mxu0 0.0
    %229 = vmatpush1.msra.mxu0 0.0
    %230 = vmatprep.subr.mxu0 0.0
    %231 = vmatpush1.msra.mxu0 0.0
    %232 = vmatprep.subr.mxu0 0.0
    %233 = vmatpush1.msra.mxu0 0.0
    %234 = vmatprep.subr.mxu0 0.0
    %235 = vmatpush1.msra.mxu0 0.0
    %236 = vmatprep.subr.mxu0 0.0
    %237 = vmatpush1.msra.mxu0 0.0
    %238 = vmatprep.subr.mxu0 0.0
    %239 = vmatpush1.msra.mxu0 0.0
    %240 = vmatprep.subr.mxu0 0.0
    %241 = vmatpush1.msra.mxu0 0.0
    %242 = vmatprep.subr.mxu0 0.0
    %243 = vmatpush1.msra.mxu0 0.0
    %244 = vmatprep.subr.mxu0 0.0
    %245 = vmatpush1.msra.mxu0 0.0
    %246 = vmatprep.subr.mxu0 0.0
    %247 = vmatpush1.msra.mxu0 0.0
    %248 = vmatprep.subr.mxu0 0.0
    %249 = vmatpush1.msra.mxu0 0.0
    %250 = vmatprep.mubr.f32.mxu0 0.0
    %251 = vmatmul.mubr.f32.gmra.mrb[0].mxu0 %v184
    %v252 = vpop.f32.mrb[0].mxu0
    %v253 = vadd.f32 0.0, %v252
    %v254 = vpop.f32.mrb[0].mxu0
    %255 = vdwg.mxu0
    %v256 = vadd.f32 %v144, %v253
    %v257 = vxor.u32 %v256, 2147483648
    %v258 = vmul.f32 %v257, 1.442695
    %v259 = vpow.pop %v258
    %v260 = vadd.f32 %v259, 1.0
    %v261 = vrcp.pop %v260
    %v262 = vmul.f32 1.0, %v261
    %v263 = vtanh.pop %v256
    %v264 = vmul.f32 %v262, 0.0
    %266 = vrot.lane.b32.xlu0 %v263, 64
    %v267 = vpop.permute.xlu0 %266
    %v269 = vmul.f32 %v262, %v267
    %271 = vrot.lane.b32.xlu0 %v269, 32
    %v272 = vpop.permute.xlu0 %271
    %v274 = vadd.f32 %v264, %v272
    %v275 = vtanh.pop %v274
    %277 = vrot.lane.b32.xlu0 %v275, 64
    %v278 = vpop.permute.xlu0 %277
    %v280 = vmul.f32 %v262, %v278
    %282 = vrot.lane.b32.xlu0 %v280, 32
    %v283 = vpop.permute.xlu0 %282
    %v284 = vsel %vm182, %v283, 0
    %286 = vmatprep.subr.mxu0 0.0
    %287 = vmatpush1.msra.mxu0 %v32
    %288 = vmatprep.subr.mxu0 0.0
    %289 = vmatpush1.msra.mxu0 %v33
    %290 = vmatprep.subr.mxu0 0.0
    %291 = vmatpush1.msra.mxu0 %v34
    %292 = vmatprep.subr.mxu0 0.0
    %293 = vmatpush1.msra.mxu0 %v35
    %294 = vmatprep.subr.mxu0 0.0
    %295 = vmatpush1.msra.mxu0 0.0
    %296 = vmatprep.subr.mxu0 0.0
    %297 = vmatpush1.msra.mxu0 0.0
    %298 = vmatprep.subr.mxu0 0.0
    %299 = vmatpush1.msra.mxu0 0.0
    %300 = vmatprep.subr.mxu0 0.0
    %301 = vmatpush1.msra.mxu0 0.0
    %302 = vmatprep.subr.mxu0 0.0
    %303 = vmatpush1.msra.mxu0 0.0
    %304 = vmatprep.subr.mxu0 0.0
    %305 = vmatpush1.msra.mxu0 0.0
    %306 = vmatprep.subr.mxu0 0.0
    %307 = vmatpush1.msra.mxu0 0.0
    %308 = vmatprep.subr.mxu0 0.0
    %309 = vmatpush1.msra.mxu0 0.0
    %310 = vmatprep.subr.mxu0 0.0
    %311 = vmatpush1.msra.mxu0 0.0
    %312 = vmatprep.subr.mxu0 0.0
    %313 = vmatpush1.msra.mxu0 0.0
    %314 = vmatprep.subr.mxu0 0.0
    %315 = vmatpush1.msra.mxu0 0.0
    %316 = vmatprep.subr.mxu0 0.0
    %317 = vmatpush1.msra.mxu0 0.0
    %318 = vmatprep.subr.mxu0 0.0
    %319 = vmatpush1.msra.mxu0 0.0
    %320 = vmatprep.subr.mxu0 0.0
    %321 = vmatpush1.msra.mxu0 0.0
    %322 = vmatprep.subr.mxu0 0.0
    %323 = vmatpush1.msra.mxu0 0.0
    %324 = vmatprep.subr.mxu0 0.0
    %325 = vmatpush1.msra.mxu0 0.0
    %326 = vmatprep.subr.mxu0 0.0
    %327 = vmatpush1.msra.mxu0 0.0
    %328 = vmatprep.subr.mxu0 0.0
    %329 = vmatpush1.msra.mxu0 0.0
    %330 = vmatprep.subr.mxu0 0.0
    %331 = vmatpush1.msra.mxu0 0.0
    %332 = vmatprep.subr.mxu0 0.0
    %333 = vmatpush1.msra.mxu0 0.0
    %334 = vmatprep.subr.mxu0 0.0
    %335 = vmatpush1.msra.mxu0 0.0
    %336 = vmatprep.subr.mxu0 0.0
    %337 = vmatpush1.msra.mxu0 0.0
    %338 = vmatprep.subr.mxu0 0.0
    %339 = vmatpush1.msra.mxu0 0.0
    %340 = vmatprep.subr.mxu0 0.0
    %341 = vmatpush1.msra.mxu0 0.0
    %342 = vmatprep.subr.mxu0 0.0
    %343 = vmatpush1.msra.mxu0 0.0
    %344 = vmatprep.subr.mxu0 0.0
    %345 = vmatpush1.msra.mxu0 0.0
    %346 = vmatprep.subr.mxu0 0.0
    %347 = vmatpush1.msra.mxu0 0.0
    %348 = vmatprep.subr.mxu0 0.0
    %349 = vmatpush1.msra.mxu0 0.0
    %350 = vmatprep.mubr.f32.mxu0 0.0
    %351 = vmatmul.mubr.f32.gmra.mrb[0].mxu0 %v284
    %v352 = vpop.f32.mrb[0].mxu0
    %v353 = vadd.f32 0.0, %v352
    %v354 = vpop.f32.mrb[0].mxu0
    %355 = vdwg.mxu0
    %v356 = vadd.f32 %v149, %v353
    %v357 = vxor.u32 %v356, 2147483648
    %v358 = vmul.f32 %v357, 1.442695
    %v359 = vpow.pop %v358
    %v360 = vadd.f32 %v359, 1.0
    %v361 = vrcp.pop %v360
    %v362 = vmul.f32 1.0, %v361
    %v363 = vtanh.pop %v356
    %v364 = vmul.f32 %v362, %v274
    %366 = vrot.lane.b32.xlu0 %v363, 64
    %v367 = vpop.permute.xlu0 %366
    %v369 = vmul.f32 %v362, %v367
    %371 = vrot.lane.b32.xlu0 %v369, 32
    %v372 = vpop.permute.xlu0 %371
    %v374 = vadd.f32 %v364, %v372
    %v375 = vtanh.pop %v374
    %377 = vrot.lane.b32.xlu0 %v375, 64
    %v378 = vpop.permute.xlu0 %377
    %v380 = vmul.f32 %v362, %v378
    %382 = vrot.lane.b32.xlu0 %v380, 32
    %v383 = vpop.permute.xlu0 %382
    %v384 = vsel %vm182, %v383, 0
    %386 = vmatprep.subr.mxu0 0.0
    %387 = vmatpush1.msra.mxu0 %v32
    %388 = vmatprep.subr.mxu0 0.0
    %389 = vmatpush1.msra.mxu0 %v33
    %390 = vmatprep.subr.mxu0 0.0
    %391 = vmatpush1.msra.mxu0 %v34
    %392 = vmatprep.subr.mxu0 0.0
    %393 = vmatpush1.msra.mxu0 %v35
    %394 = vmatprep.subr.mxu0 0.0
    %395 = vmatpush1.msra.mxu0 0.0
    %396 = vmatprep.subr.mxu0 0.0
    %397 = vmatpush1.msra.mxu0 0.0
    %398 = vmatprep.subr.mxu0 0.0
    %399 = vmatpush1.msra.mxu0 0.0
    %400 = vmatprep.subr.mxu0 0.0
    %401 = vmatpush1.msra.mxu0 0.0
    %402 = vmatprep.subr.mxu0 0.0
    %403 = vmatpush1.msra.mxu0 0.0
    %404 = vmatprep.subr.mxu0 0.0
    %405 = vmatpush1.msra.mxu0 0.0
    %406 = vmatprep.subr.mxu0 0.0
    %407 = vmatpush1.msra.mxu0 0.0
    %408 = vmatprep.subr.mxu0 0.0
    %409 = vmatpush1.msra.mxu0 0.0
    %410 = vmatprep.subr.mxu0 0.0
    %411 = vmatpush1.msra.mxu0 0.0
    %412 = vmatprep.subr.mxu0 0.0
    %413 = vmatpush1.msra.mxu0 0.0
    %414 = vmatprep.subr.mxu0 0.0
    %415 = vmatpush1.msra.mxu0 0.0
    %416 = vmatprep.subr.mxu0 0.0
    %417 = vmatpush1.msra.mxu0 0.0
    %418 = vmatprep.subr.mxu0 0.0
    %419 = vmatpush1.msra.mxu0 0.0
    %420 = vmatprep.subr.mxu0 0.0
    %421 = vmatpush1.msra.mxu0 0.0
    %422 = vmatprep.subr.mxu0 0.0
    %423 = vmatpush1.msra.mxu0 0.0
    %424 = vmatprep.subr.mxu0 0.0
    %425 = vmatpush1.msra.mxu0 0.0
    %426 = vmatprep.subr.mxu0 0.0
    %427 = vmatpush1.msra.mxu0 0.0
    %428 = vmatprep.subr.mxu0 0.0
    %429 = vmatpush1.msra.mxu0 0.0
    %430 = vmatprep.subr.mxu0 0.0
    %431 = vmatpush1.msra.mxu0 0.0
    %432 = vmatprep.subr.mxu0 0.0
    %433 = vmatpush1.msra.mxu0 0.0
    %434 = vmatprep.subr.mxu0 0.0
    %435 = vmatpush1.msra.mxu0 0.0
    %436 = vmatprep.subr.mxu0 0.0
    %437 = vmatpush1.msra.mxu0 0.0
    %438 = vmatprep.subr.mxu0 0.0
    %439 = vmatpush1.msra.mxu0 0.0
    %440 = vmatprep.subr.mxu0 0.0
    %441 = vmatpush1.msra.mxu0 0.0
    %442 = vmatprep.subr.mxu0 0.0
    %443 = vmatpush1.msra.mxu0 0.0
    %444 = vmatprep.subr.mxu0 0.0
    %445 = vmatpush1.msra.mxu0 0.0
    %446 = vmatprep.subr.mxu0 0.0
    %447 = vmatpush1.msra.mxu0 0.0
    %448 = vmatprep.subr.mxu0 0.0
    %449 = vmatpush1.msra.mxu0 0.0
    %450 = vmatprep.mubr.f32.mxu0 0.0
    %451 = vmatmul.mubr.f32.gmra.mrb[0].mxu0 %v384
    %v452 = vpop.f32.mrb[0].mxu0
    %v453 = vadd.f32 0.0, %v452
    %v454 = vpop.f32.mrb[0].mxu0
    %455 = vdwg.mxu0
    %v456 = vadd.f32 %v154, %v453
    %v457 = vxor.u32 %v456, 2147483648
    %v458 = vmul.f32 %v457, 1.442695
    %v459 = vpow.pop %v458
    %v460 = vadd.f32 %v459, 1.0
    %v461 = vrcp.pop %v460
    %v462 = vmul.f32 1.0, %v461
    %v463 = vtanh.pop %v456
    %v464 = vmul.f32 %v462, %v374
    %466 = vrot.lane.b32.xlu0 %v463, 64
    %v467 = vpop.permute.xlu0 %466
    %v469 = vmul.f32 %v462, %v467
    %471 = vrot.lane.b32.xlu0 %v469, 32
    %v472 = vpop.permute.xlu0 %471
    %v474 = vadd.f32 %v464, %v472
    %v475 = vtanh.pop %v474
    %477 = vrot.lane.b32.xlu0 %v475, 64
    %v478 = vpop.permute.xlu0 %477
    %v480 = vmul.f32 %v462, %v478
    %482 = vrot.lane.b32.xlu0 %v480, 32
    %v483 = vpop.permute.xlu0 %482
    %v484 = vsel %vm182, %v483, 0
    %486 = vmatprep.subr.mxu0 0.0
    %487 = vmatpush1.msra.mxu0 %v32
    %488 = vmatprep.subr.mxu0 0.0
    %489 = vmatpush1.msra.mxu0 %v33
    %490 = vmatprep.subr.mxu0 0.0
    %491 = vmatpush1.msra.mxu0 %v34
    %492 = vmatprep.subr.mxu0 0.0
    %493 = vmatpush1.msra.mxu0 %v35
    %494 = vmatprep.subr.mxu0 0.0
    %495 = vmatpush1.msra.mxu0 0.0
    %496 = vmatprep.subr.mxu0 0.0
    %497 = vmatpush1.msra.mxu0 0.0
    %498 = vmatprep.subr.mxu0 0.0
    %499 = vmatpush1.msra.mxu0 0.0
    %500 = vmatprep.subr.mxu0 0.0
    %501 = vmatpush1.msra.mxu0 0.0
    %502 = vmatprep.subr.mxu0 0.0
    %503 = vmatpush1.msra.mxu0 0.0
    %504 = vmatprep.subr.mxu0 0.0
    %505 = vmatpush1.msra.mxu0 0.0
    %506 = vmatprep.subr.mxu0 0.0
    %507 = vmatpush1.msra.mxu0 0.0
    %508 = vmatprep.subr.mxu0 0.0
    %509 = vmatpush1.msra.mxu0 0.0
    %510 = vmatprep.subr.mxu0 0.0
    %511 = vmatpush1.msra.mxu0 0.0
    %512 = vmatprep.subr.mxu0 0.0
    %513 = vmatpush1.msra.mxu0 0.0
    %514 = vmatprep.subr.mxu0 0.0
    %515 = vmatpush1.msra.mxu0 0.0
    %516 = vmatprep.subr.mxu0 0.0
    %517 = vmatpush1.msra.mxu0 0.0
    %518 = vmatprep.subr.mxu0 0.0
    %519 = vmatpush1.msra.mxu0 0.0
    %520 = vmatprep.subr.mxu0 0.0
    %521 = vmatpush1.msra.mxu0 0.0
    %522 = vmatprep.subr.mxu0 0.0
    %523 = vmatpush1.msra.mxu0 0.0
    %524 = vmatprep.subr.mxu0 0.0
    %525 = vmatpush1.msra.mxu0 0.0
    %526 = vmatprep.subr.mxu0 0.0
    %527 = vmatpush1.msra.mxu0 0.0
    %528 = vmatprep.subr.mxu0 0.0
    %529 = vmatpush1.msra.mxu0 0.0
    %530 = vmatprep.subr.mxu0 0.0
    %531 = vmatpush1.msra.mxu0 0.0
    %532 = vmatprep.subr.mxu0 0.0
    %533 = vmatpush1.msra.mxu0 0.0
    %534 = vmatprep.subr.mxu0 0.0
    %535 = vmatpush1.msra.mxu0 0.0
    %536 = vmatprep.subr.mxu0 0.0
    %537 = vmatpush1.msra.mxu0 0.0
    %538 = vmatprep.subr.mxu0 0.0
    %539 = vmatpush1.msra.mxu0 0.0
    %540 = vmatprep.subr.mxu0 0.0
    %541 = vmatpush1.msra.mxu0 0.0
    %542 = vmatprep.subr.mxu0 0.0
    %543 = vmatpush1.msra.mxu0 0.0
    %544 = vmatprep.subr.mxu0 0.0
    %545 = vmatpush1.msra.mxu0 0.0
    %546 = vmatprep.subr.mxu0 0.0
    %547 = vmatpush1.msra.mxu0 0.0
    %548 = vmatprep.subr.mxu0 0.0
    %549 = vmatpush1.msra.mxu0 0.0
    %550 = vmatprep.mubr.f32.mxu0 0.0
    %551 = vmatmul.mubr.f32.gmra.mrb[0].mxu0 %v484
    %v552 = vpop.f32.mrb[0].mxu0
    %v553 = vadd.f32 0.0, %v552
    %v554 = vpop.f32.mrb[0].mxu0
    %555 = vdwg.mxu0
    %v556 = vadd.f32 %v159, %v553
    %v557 = vxor.u32 %v556, 2147483648
    %v558 = vmul.f32 %v557, 1.442695
    %v559 = vpow.pop %v558
    %v560 = vadd.f32 %v559, 1.0
    %v561 = vrcp.pop %v560
    %v562 = vmul.f32 1.0, %v561
    %v563 = vtanh.pop %v556
    %v564 = vmul.f32 %v562, %v474
    %566 = vrot.lane.b32.xlu0 %v563, 64
    %v567 = vpop.permute.xlu0 %566
    %v569 = vmul.f32 %v562, %v567
    %571 = vrot.lane.b32.xlu0 %v569, 32
    %v572 = vpop.permute.xlu0 %571
    %v574 = vadd.f32 %v564, %v572
    %v575 = vtanh.pop %v574
    %577 = vrot.lane.b32.xlu0 %v575, 64
    %v578 = vpop.permute.xlu0 %577
    %v580 = vmul.f32 %v562, %v578
    %582 = vrot.lane.b32.xlu0 %v580, 32
    %v583 = vpop.permute.xlu0 %582
    %v584 = vsel %vm182, %v583, 0
    %586 = vmatprep.subr.mxu0 0.0
    %587 = vmatpush1.msra.mxu0 %v32
    %588 = vmatprep.subr.mxu0 0.0
    %589 = vmatpush1.msra.mxu0 %v33
    %590 = vmatprep.subr.mxu0 0.0
    %591 = vmatpush1.msra.mxu0 %v34
    %592 = vmatprep.subr.mxu0 0.0
    %593 = vmatpush1.msra.mxu0 %v35
    %594 = vmatprep.subr.mxu0 0.0
    %595 = vmatpush1.msra.mxu0 0.0
    %596 = vmatprep.subr.mxu0 0.0
    %597 = vmatpush1.msra.mxu0 0.0
    %598 = vmatprep.subr.mxu0 0.0
    %599 = vmatpush1.msra.mxu0 0.0
    %600 = vmatprep.subr.mxu0 0.0
    %601 = vmatpush1.msra.mxu0 0.0
    %602 = vmatprep.subr.mxu0 0.0
    %603 = vmatpush1.msra.mxu0 0.0
    %604 = vmatprep.subr.mxu0 0.0
    %605 = vmatpush1.msra.mxu0 0.0
    %606 = vmatprep.subr.mxu0 0.0
    %607 = vmatpush1.msra.mxu0 0.0
    %608 = vmatprep.subr.mxu0 0.0
    %609 = vmatpush1.msra.mxu0 0.0
    %610 = vmatprep.subr.mxu0 0.0
    %611 = vmatpush1.msra.mxu0 0.0
    %612 = vmatprep.subr.mxu0 0.0
    %613 = vmatpush1.msra.mxu0 0.0
    %614 = vmatprep.subr.mxu0 0.0
    %615 = vmatpush1.msra.mxu0 0.0
    %616 = vmatprep.subr.mxu0 0.0
    %617 = vmatpush1.msra.mxu0 0.0
    %618 = vmatprep.subr.mxu0 0.0
    %619 = vmatpush1.msra.mxu0 0.0
    %620 = vmatprep.subr.mxu0 0.0
    %621 = vmatpush1.msra.mxu0 0.0
    %622 = vmatprep.subr.mxu0 0.0
    %623 = vmatpush1.msra.mxu0 0.0
    %624 = vmatprep.subr.mxu0 0.0
    %625 = vmatpush1.msra.mxu0 0.0
    %626 = vmatprep.subr.mxu0 0.0
    %627 = vmatpush1.msra.mxu0 0.0
    %628 = vmatprep.subr.mxu0 0.0
    %629 = vmatpush1.msra.mxu0 0.0
    %630 = vmatprep.subr.mxu0 0.0
    %631 = vmatpush1.msra.mxu0 0.0
    %632 = vmatprep.subr.mxu0 0.0
    %633 = vmatpush1.msra.mxu0 0.0
    %634 = vmatprep.subr.mxu0 0.0
    %635 = vmatpush1.msra.mxu0 0.0
    %636 = vmatprep.subr.mxu0 0.0
    %637 = vmatpush1.msra.mxu0 0.0
    %638 = vmatprep.subr.mxu0 0.0
    %639 = vmatpush1.msra.mxu0 0.0
    %640 = vmatprep.subr.mxu0 0.0
    %641 = vmatpush1.msra.mxu0 0.0
    %642 = vmatprep.subr.mxu0 0.0
    %643 = vmatpush1.msra.mxu0 0.0
    %644 = vmatprep.subr.mxu0 0.0
    %645 = vmatpush1.msra.mxu0 0.0
    %646 = vmatprep.subr.mxu0 0.0
    %647 = vmatpush1.msra.mxu0 0.0
    %648 = vmatprep.subr.mxu0 0.0
    %649 = vmatpush1.msra.mxu0 0.0
    %650 = vmatprep.mubr.f32.mxu0 0.0
    %651 = vmatmul.mubr.f32.gmra.mrb[0].mxu0 %v584
    %v652 = vpop.f32.mrb[0].mxu0
    %v653 = vadd.f32 0.0, %v652
    %v654 = vpop.f32.mrb[0].mxu0
    %655 = vdwg.mxu0
    %v656 = vadd.f32 %v164, %v653
    %v657 = vxor.u32 %v656, 2147483648
    %v658 = vmul.f32 %v657, 1.442695
    %v659 = vpow.pop %v658
    %v660 = vadd.f32 %v659, 1.0
    %v661 = vrcp.pop %v660
    %v662 = vmul.f32 1.0, %v661
    %v663 = vtanh.pop %v656
    %v664 = vmul.f32 %v662, %v574
    %666 = vrot.lane.b32.xlu0 %v663, 64
    %v667 = vpop.permute.xlu0 %666
    %v669 = vmul.f32 %v662, %v667
    %671 = vrot.lane.b32.xlu0 %v669, 32
    %v672 = vpop.permute.xlu0 %671
    %v674 = vadd.f32 %v664, %v672
    %v675 = vtanh.pop %v674
    %677 = vrot.lane.b32.xlu0 %v675, 64
    %v678 = vpop.permute.xlu0 %677
    %v680 = vmul.f32 %v662, %v678
    %682 = vrot.lane.b32.xlu0 %v680, 32
    %v683 = vpop.permute.xlu0 %682
    %v684 = vsel %vm182, %v683, 0
    %686 = vmatprep.subr.mxu0 0.0
    %687 = vmatpush1.msra.mxu0 %v32
    %688 = vmatprep.subr.mxu0 0.0
    %689 = vmatpush1.msra.mxu0 %v33
    %690 = vmatprep.subr.mxu0 0.0
    %691 = vmatpush1.msra.mxu0 %v34
    %692 = vmatprep.subr.mxu0 0.0
    %693 = vmatpush1.msra.mxu0 %v35
    %694 = vmatprep.subr.mxu0 0.0
    %695 = vmatpush1.msra.mxu0 0.0
    %696 = vmatprep.subr.mxu0 0.0
    %697 = vmatpush1.msra.mxu0 0.0
    %698 = vmatprep.subr.mxu0 0.0
    %699 = vmatpush1.msra.mxu0 0.0
    %700 = vmatprep.subr.mxu0 0.0
    %701 = vmatpush1.msra.mxu0 0.0
    %702 = vmatprep.subr.mxu0 0.0
    %703 = vmatpush1.msra.mxu0 0.0
    %704 = vmatprep.subr.mxu0 0.0
    %705 = vmatpush1.msra.mxu0 0.0
    %706 = vmatprep.subr.mxu0 0.0
    %707 = vmatpush1.msra.mxu0 0.0
    %708 = vmatprep.subr.mxu0 0.0
    %709 = vmatpush1.msra.mxu0 0.0
    %710 = vmatprep.subr.mxu0 0.0
    %711 = vmatpush1.msra.mxu0 0.0
    %712 = vmatprep.subr.mxu0 0.0
    %713 = vmatpush1.msra.mxu0 0.0
    %714 = vmatprep.subr.mxu0 0.0
    %715 = vmatpush1.msra.mxu0 0.0
    %716 = vmatprep.subr.mxu0 0.0
    %717 = vmatpush1.msra.mxu0 0.0
    %718 = vmatprep.subr.mxu0 0.0
    %719 = vmatpush1.msra.mxu0 0.0
    %720 = vmatprep.subr.mxu0 0.0
    %721 = vmatpush1.msra.mxu0 0.0
    %722 = vmatprep.subr.mxu0 0.0
    %723 = vmatpush1.msra.mxu0 0.0
    %724 = vmatprep.subr.mxu0 0.0
    %725 = vmatpush1.msra.mxu0 0.0
    %726 = vmatprep.subr.mxu0 0.0
    %727 = vmatpush1.msra.mxu0 0.0
    %728 = vmatprep.subr.mxu0 0.0
    %729 = vmatpush1.msra.mxu0 0.0
    %730 = vmatprep.subr.mxu0 0.0
    %731 = vmatpush1.msra.mxu0 0.0
    %732 = vmatprep.subr.mxu0 0.0
    %733 = vmatpush1.msra.mxu0 0.0
    %734 = vmatprep.subr.mxu0 0.0
    %735 = vmatpush1.msra.mxu0 0.0
    %736 = vmatprep.subr.mxu0 0.0
    %737 = vmatpush1.msra.mxu0 0.0
    %738 = vmatprep.subr.mxu0 0.0
    %739 = vmatpush1.msra.mxu0 0.0
    %740 = vmatprep.subr.mxu0 0.0
    %741 = vmatpush1.msra.mxu0 0.0
    %742 = vmatprep.subr.mxu0 0.0
    %743 = vmatpush1.msra.mxu0 0.0
    %744 = vmatprep.subr.mxu0 0.0
    %745 = vmatpush1.msra.mxu0 0.0
    %746 = vmatprep.subr.mxu0 0.0
    %747 = vmatpush1.msra.mxu0 0.0
    %748 = vmatprep.subr.mxu0 0.0
    %749 = vmatpush1.msra.mxu0 0.0
    %750 = vmatprep.mubr.f32.mxu0 0.0
    %751 = vmatmul.mubr.f32.gmra.mrb[0].mxu0 %v684
    %v752 = vpop.f32.mrb[0].mxu0
    %v753 = vadd.f32 0.0, %v752
    %v754 = vpop.f32.mrb[0].mxu0
    %755 = vdwg.mxu0
    %v756 = vadd.f32 %v169, %v753
    %v757 = vxor.u32 %v756, 2147483648
    %v758 = vmul.f32 %v757, 1.442695
    %v759 = vpow.pop %v758
    %v760 = vadd.f32 %v759, 1.0
    %v761 = vrcp.pop %v760
    %v762 = vmul.f32 1.0, %v761
    %v763 = vtanh.pop %v756
    %v764 = vmul.f32 %v762, %v674
    %766 = vrot.lane.b32.xlu0 %v763, 64
    %v767 = vpop.permute.xlu0 %766
    %v769 = vmul.f32 %v762, %v767
    %771 = vrot.lane.b32.xlu0 %v769, 32
    %v772 = vpop.permute.xlu0 %771
    %v774 = vadd.f32 %v764, %v772
    %v775 = vtanh.pop %v774
    %777 = vrot.lane.b32.xlu0 %v775, 64
    %v778 = vpop.permute.xlu0 %777
    %v780 = vmul.f32 %v762, %v778
    %782 = vrot.lane.b32.xlu0 %v780, 32
    %v783 = vpop.permute.xlu0 %782
    %v784 = vsel %vm182, %v783, 0
    %786 = vmatprep.subr.mxu0 0.0
    %787 = vmatpush1.msra.mxu0 %v32
    %788 = vmatprep.subr.mxu0 0.0
    %789 = vmatpush1.msra.mxu0 %v33
    %790 = vmatprep.subr.mxu0 0.0
    %791 = vmatpush1.msra.mxu0 %v34
    %792 = vmatprep.subr.mxu0 0.0
    %793 = vmatpush1.msra.mxu0 %v35
    %794 = vmatprep.subr.mxu0 0.0
    %795 = vmatpush1.msra.mxu0 0.0
    %796 = vmatprep.subr.mxu0 0.0
    %797 = vmatpush1.msra.mxu0 0.0
    %798 = vmatprep.subr.mxu0 0.0
    %799 = vmatpush1.msra.mxu0 0.0
    %800 = vmatprep.subr.mxu0 0.0
    %801 = vmatpush1.msra.mxu0 0.0
    %802 = vmatprep.subr.mxu0 0.0
    %803 = vmatpush1.msra.mxu0 0.0
    %804 = vmatprep.subr.mxu0 0.0
    %805 = vmatpush1.msra.mxu0 0.0
    %806 = vmatprep.subr.mxu0 0.0
    %807 = vmatpush1.msra.mxu0 0.0
    %808 = vmatprep.subr.mxu0 0.0
    %809 = vmatpush1.msra.mxu0 0.0
    %810 = vmatprep.subr.mxu0 0.0
    %811 = vmatpush1.msra.mxu0 0.0
    %812 = vmatprep.subr.mxu0 0.0
    %813 = vmatpush1.msra.mxu0 0.0
    %814 = vmatprep.subr.mxu0 0.0
    %815 = vmatpush1.msra.mxu0 0.0
    %816 = vmatprep.subr.mxu0 0.0
    %817 = vmatpush1.msra.mxu0 0.0
    %818 = vmatprep.subr.mxu0 0.0
    %819 = vmatpush1.msra.mxu0 0.0
    %820 = vmatprep.subr.mxu0 0.0
    %821 = vmatpush1.msra.mxu0 0.0
    %822 = vmatprep.subr.mxu0 0.0
    %823 = vmatpush1.msra.mxu0 0.0
    %824 = vmatprep.subr.mxu0 0.0
    %825 = vmatpush1.msra.mxu0 0.0
    %826 = vmatprep.subr.mxu0 0.0
    %827 = vmatpush1.msra.mxu0 0.0
    %828 = vmatprep.subr.mxu0 0.0
    %829 = vmatpush1.msra.mxu0 0.0
    %830 = vmatprep.subr.mxu0 0.0
    %831 = vmatpush1.msra.mxu0 0.0
    %832 = vmatprep.subr.mxu0 0.0
    %833 = vmatpush1.msra.mxu0 0.0
    %834 = vmatprep.subr.mxu0 0.0
    %835 = vmatpush1.msra.mxu0 0.0
    %836 = vmatprep.subr.mxu0 0.0
    %837 = vmatpush1.msra.mxu0 0.0
    %838 = vmatprep.subr.mxu0 0.0
    %839 = vmatpush1.msra.mxu0 0.0
    %840 = vmatprep.subr.mxu0 0.0
    %841 = vmatpush1.msra.mxu0 0.0
    %842 = vmatprep.subr.mxu0 0.0
    %843 = vmatpush1.msra.mxu0 0.0
    %844 = vmatprep.subr.mxu0 0.0
    %845 = vmatpush1.msra.mxu0 0.0
    %846 = vmatprep.subr.mxu0 0.0
    %847 = vmatpush1.msra.mxu0 0.0
    %848 = vmatprep.subr.mxu0 0.0
    %849 = vmatpush1.msra.mxu0 0.0
    %850 = vmatprep.mubr.f32.mxu0 0.0
    %851 = vmatmul.mubr.f32.gmra.mrb[0].mxu0 %v784
    %v852 = vpop.f32.mrb[0].mxu0
    %v853 = vadd.f32 0.0, %v852
    %v854 = vpop.f32.mrb[0].mxu0
    %855 = vdwg.mxu0
    %v856 = vadd.f32 %v174, %v853
    %v857 = vxor.u32 %v856, 2147483648
    %v858 = vmul.f32 %v857, 1.442695
    %v859 = vpow.pop %v858
    %v860 = vadd.f32 %v859, 1.0
    %v861 = vrcp.pop %v860
    %v862 = vmul.f32 1.0, %v861
    %v863 = vtanh.pop %v856
    %v864 = vmul.f32 %v862, %v774
    %866 = vrot.lane.b32.xlu0 %v863, 64
    %v867 = vpop.permute.xlu0 %866
    %v869 = vmul.f32 %v862, %v867
    %871 = vrot.lane.b32.xlu0 %v869, 32
    %v872 = vpop.permute.xlu0 %871
    %v874 = vadd.f32 %v864, %v872
    %v875 = vtanh.pop %v874
    %877 = vrot.lane.b32.xlu0 %v875, 64
    %v878 = vpop.permute.xlu0 %877
    %v880 = vmul.f32 %v862, %v878
    %882 = vrot.lane.b32.xlu0 %v880, 32
    %v883 = vpop.permute.xlu0 %882
    %v884 = vsel %vm182, %v883, 0
    %886 = vmatprep.subr.mxu0 0.0
    %887 = vmatpush1.msra.mxu0 %v32
    %888 = vmatprep.subr.mxu0 0.0
    %889 = vmatpush1.msra.mxu0 %v33
    %890 = vmatprep.subr.mxu0 0.0
    %891 = vmatpush1.msra.mxu0 %v34
    %892 = vmatprep.subr.mxu0 0.0
    %893 = vmatpush1.msra.mxu0 %v35
    %894 = vmatprep.subr.mxu0 0.0
    %895 = vmatpush1.msra.mxu0 0.0
    %896 = vmatprep.subr.mxu0 0.0
    %897 = vmatpush1.msra.mxu0 0.0
    %898 = vmatprep.subr.mxu0 0.0
    %899 = vmatpush1.msra.mxu0 0.0
    %900 = vmatprep.subr.mxu0 0.0
    %901 = vmatpush1.msra.mxu0 0.0
    %902 = vmatprep.subr.mxu0 0.0
    %903 = vmatpush1.msra.mxu0 0.0
    %904 = vmatprep.subr.mxu0 0.0
    %905 = vmatpush1.msra.mxu0 0.0
    %906 = vmatprep.subr.mxu0 0.0
    %907 = vmatpush1.msra.mxu0 0.0
    %908 = vmatprep.subr.mxu0 0.0
    %909 = vmatpush1.msra.mxu0 0.0
    %910 = vmatprep.subr.mxu0 0.0
    %911 = vmatpush1.msra.mxu0 0.0
    %912 = vmatprep.subr.mxu0 0.0
    %913 = vmatpush1.msra.mxu0 0.0
    %914 = vmatprep.subr.mxu0 0.0
    %915 = vmatpush1.msra.mxu0 0.0
    %916 = vmatprep.subr.mxu0 0.0
    %917 = vmatpush1.msra.mxu0 0.0
    %918 = vmatprep.subr.mxu0 0.0
    %919 = vmatpush1.msra.mxu0 0.0
    %920 = vmatprep.subr.mxu0 0.0
    %921 = vmatpush1.msra.mxu0 0.0
    %922 = vmatprep.subr.mxu0 0.0
    %923 = vmatpush1.msra.mxu0 0.0
    %924 = vmatprep.subr.mxu0 0.0
    %925 = vmatpush1.msra.mxu0 0.0
    %926 = vmatprep.subr.mxu0 0.0
    %927 = vmatpush1.msra.mxu0 0.0
    %928 = vmatprep.subr.mxu0 0.0
    %929 = vmatpush1.msra.mxu0 0.0
    %930 = vmatprep.subr.mxu0 0.0
    %931 = vmatpush1.msra.mxu0 0.0
    %932 = vmatprep.subr.mxu0 0.0
    %933 = vmatpush1.msra.mxu0 0.0
    %934 = vmatprep.subr.mxu0 0.0
    %935 = vmatpush1.msra.mxu0 0.0
    %936 = vmatprep.subr.mxu0 0.0
    %937 = vmatpush1.msra.mxu0 0.0
    %938 = vmatprep.subr.mxu0 0.0
    %939 = vmatpush1.msra.mxu0 0.0
    %940 = vmatprep.subr.mxu0 0.0
    %941 = vmatpush1.msra.mxu0 0.0
    %942 = vmatprep.subr.mxu0 0.0
    %943 = vmatpush1.msra.mxu0 0.0
    %944 = vmatprep.subr.mxu0 0.0
    %945 = vmatpush1.msra.mxu0 0.0
    %946 = vmatprep.subr.mxu0 0.0
    %947 = vmatpush1.msra.mxu0 0.0
    %948 = vmatprep.subr.mxu0 0.0
    %949 = vmatpush1.msra.mxu0 0.0
    %950 = vmatprep.mubr.f32.mxu0 0.0
    %951 = vmatmul.mubr.f32.gmra.mrb[0].mxu0 %v884
    %v952 = vpop.f32.mrb[0].mxu0
    %v953 = vadd.f32 0.0, %v952
    %v954 = vpop.f32.mrb[0].mxu0
    %955 = vdwg.mxu0
    %v956 = vadd.f32 %v179, %v953
    %v957 = vxor.u32 %v956, 2147483648
    %v958 = vmul.f32 %v957, 1.442695
    %v959 = vpow.pop %v958
    %v960 = vadd.f32 %v959, 1.0
    %v961 = vrcp.pop %v960
    %v962 = vmul.f32 1.0, %v961
    %v963 = vtanh.pop %v956
    %v964 = vmul.f32 %v962, %v874
    %966 = vrot.lane.b32.xlu0 %v963, 64
    %v967 = vpop.permute.xlu0 %966
    %v969 = vmul.f32 %v962, %v967
    %971 = vrot.lane.b32.xlu0 %v969, 32
    %v972 = vpop.permute.xlu0 %971
    %v974 = vadd.f32 %v964, %v972
    %v975 = vtanh.pop %v974
    %977 = vrot.lane.b32.xlu0 %v975, 64
    %v978 = vpop.permute.xlu0 %977
    %v980 = vmul.f32 %v962, %v978
    %v981 = vtanh.pop %v980
    %v982 = vld [vmem:[%s4] sm:$0xff]
    %v983 = vld [vmem:[%s4 + $0x8] sm:$0xff]
    %v984 = vld [vmem:[%s4 + $0x10] sm:$0xff]
    %v985 = vld [vmem:[%s4 + $0x18] sm:$0xff]
    %v986 = vld [vmem:[%s5] sm:$0x1]
    %v988 = vlaneseq
    %v989 = vshrl.u32 %v988, 7
    %v990 = vsub.s32 0, %v989
    %v991 = vrot.slane %v986, %v990
    %994 = vrot.lane.b32.xlu0 %v981, 32
    %v995 = vpop.permute.xlu0 %994
    %v996 = vsel %vm182, %v995, 0
    %998 = vmatprep.subr.mxu0 0.0
    %999 = vmatpush1.msra.mxu0 %v982
    %1000 = vmatprep.subr.mxu0 0.0
    %1001 = vmatpush1.msra.mxu0 %v983
    %1002 = vmatprep.subr.mxu0 0.0
    %1003 = vmatpush1.msra.mxu0 %v984
    %1004 = vmatprep.subr.mxu0 0.0
    %1005 = vmatpush1.msra.mxu0 %v985
    %1006 = vmatprep.subr.mxu0 0.0
    %1007 = vmatpush1.msra.mxu0 0.0
    %1008 = vmatprep.subr.mxu0 0.0
    %1009 = vmatpush1.msra.mxu0 0.0
    %1010 = vmatprep.subr.mxu0 0.0
    %1011 = vmatpush1.msra.mxu0 0.0
    %1012 = vmatprep.subr.mxu0 0.0
    %1013 = vmatpush1.msra.mxu0 0.0
    %1014 = vmatprep.subr.mxu0 0.0
    %1015 = vmatpush1.msra.mxu0 0.0
    %1016 = vmatprep.subr.mxu0 0.0
    %1017 = vmatpush1.msra.mxu0 0.0
    %1018 = vmatprep.subr.mxu0 0.0
    %1019 = vmatpush1.msra.mxu0 0.0
    %1020 = vmatprep.subr.mxu0 0.0
    %1021 = vmatpush1.msra.mxu0 0.0
    %1022 = vmatprep.subr.mxu0 0.0
    %1023 = vmatpush1.msra.mxu0 0.0
    %1024 = vmatprep.subr.mxu0 0.0
    %1025 = vmatpush1.msra.mxu0 0.0
    %1026 = vmatprep.subr.mxu0 0.0
    %1027 = vmatpush1.msra.mxu0 0.0
    %1028 = vmatprep.subr.mxu0 0.0
    %1029 = vmatpush1.msra.mxu0 0.0
    %1030 = vmatprep.subr.mxu0 0.0
    %1031 = vmatpush1.msra.mxu0 0.0
    %1032 = vmatprep.subr.mxu0 0.0
    %1033 = vmatpush1.msra.mxu0 0.0
    %1034 = vmatprep.subr.mxu0 0.0
    %1035 = vmatpush1.msra.mxu0 0.0
    %1036 = vmatprep.subr.mxu0 0.0
    %1037 = vmatpush1.msra.mxu0 0.0
    %1038 = vmatprep.subr.mxu0 0.0
    %1039 = vmatpush1.msra.mxu0 0.0
    %1040 = vmatprep.subr.mxu0 0.0
    %1041 = vmatpush1.msra.mxu0 0.0
    %1042 = vmatprep.subr.mxu0 0.0
    %1043 = vmatpush1.msra.mxu0 0.0
    %1044 = vmatprep.subr.mxu0 0.0
    %1045 = vmatpush1.msra.mxu0 0.0
    %1046 = vmatprep.subr.mxu0 0.0
    %1047 = vmatpush1.msra.mxu0 0.0
    %1048 = vmatprep.subr.mxu0 0.0
    %1049 = vmatpush1.msra.mxu0 0.0
    %1050 = vmatprep.subr.mxu0 0.0
    %1051 = vmatpush1.msra.mxu0 0.0
    %1052 = vmatprep.subr.mxu0 0.0
    %1053 = vmatpush1.msra.mxu0 0.0
    %1054 = vmatprep.subr.mxu0 0.0
    %1055 = vmatpush1.msra.mxu0 0.0
    %1056 = vmatprep.subr.mxu0 0.0
    %1057 = vmatpush1.msra.mxu0 0.0
    %1058 = vmatprep.subr.mxu0 0.0
    %1059 = vmatpush1.msra.mxu0 0.0
    %1060 = vmatprep.subr.mxu0 0.0
    %1061 = vmatpush1.msra.mxu0 0.0
    %1062 = vmatprep.mubr.f32.mxu0 0.0
    %1063 = vmatmul.mubr.f32.gmra.mrb[0].mxu0 %v996
    %v1064 = vpop.f32.mrb[0].mxu0
    %v1065 = vadd.f32 %v991, %v1064
    %v1066 = vpop.f32.mrb[0].mxu0
    %1067 = vdwg.mxu0
    %v1068 = vmin.f32 %v1065, 0.0
    %v1069 = vand.u32 2147483647, %v1065
    %v1070 = vsub.f32 0.0, %v1069
    %v1071 = vmul.f32 %v1070, 1.442695
    %v1072 = vpow.pop %v1071
    %v1073 = vadd.f32 %v1072, 1.0
    %v1074 = vlog2.pop %v1073
    %v1075 = vmul.f32 %v1074, 0.6931472
    %v1076 = vmul.f32 -0.5, %v1072
    %v1077 = vadd.f32 %v1076, 1.0
    %v1078 = vmul.f32 %v1077, %v1072
    %v1079 = vand.u32 2147483647, %v1072
    %vm1080 = vcmp.lt.f32.partialorder %v1079, 0.0004427343
    %v1081 = vsel %vm1080, %v1078, %v1075
    %v1082 = vsub.f32 %v1068, %v1081
    %v1083 = vld [vmem:[%s6] sm:$0x1]
    %v1085 = vlaneseq
    %v1086 = vshrl.u32 %v1085, 7
    %v1087 = vsub.s32 0, %v1086
    %v1088 = vrot.slane %v1083, %v1087
    %v1090 = vmul.f32 %v1082, %v1088
    %v1091 = vsel %vm182, %v1090, 0.0
    %1092 = vadd.xlane.f32.xlu0 %v1091
    %v1093 = vpop.xlane.xlu0 %1092
    %v1094 = vld [vmem:[#allocation2] sm:$0x1]
    %v1096 = vlaneseq
    %v1097 = vshrl.u32 %v1096, 7
    %v1098 = vsub.s32 0, %v1097
    %v1099 = vrot.slane %v1094, %v1098
    %v1101 = vadd.f32 %v1093, %v1099
    %1103 = vset.pattern.permute.xlu0 0
    %1104 = vperm.xlu0 %1103, %v1101
    %v1105 = vpop.permute.xlu0 %1104
    %1107 = vst [vmem:[#allocation3] sm:$0xff] %v1105
    // Predicated region
    $region34: #{tpu_custom_call.1} parent=1 // pred_check
      _
    $region35: #{tpu_custom_call.1} parent=1 // pred_check_branch
      %1109 = sbr.rel (0) target = $region37
    $region36: #{tpu_custom_call.1} parent=1 // pred_region
      %s1111 = ssub.s32 128, 128
      %1112 = vsyncadd [#allocation4], %s1111
      %s1114 = sshll.u32 [#allocation3], 4
      %s1115 = int_to_ptr.vmem [resolvable:$true] %s1114
      %1117 = dma.vmem_to_hbm [thread:$0]  %s1115, 128, %s8, [#allocation4]
    $region37: #{tpu_custom_call.1} parent=1 // pred_fallthru
      _
    // Predicated region
    $region38: #{tpu_custom_call.1} parent=1 // pred_check
      _
    $region39: #{tpu_custom_call.1} parent=1 // pred_check_branch
      %1119 = sbr.rel (0) target = $region41
    $region40: #{tpu_custom_call.1} parent=1 // pred_region
      %1120 = dma.done [#allocation4], 128
    $region41: #{tpu_custom_call.1} parent=1 // pred_fallthru
      _
    %1121 = vsyncpa [#allocation4], 1

</llo_original>
